<compile_context>
chip_gen: v5e
topology: v5e:2x2
jax: 0.10.0
libtpu: 0.0.40
codegen_flags: <defaults>
</compile_context>

<pallas_src>
import jax
import jax.numpy as jnp
from jax.experimental import pallas as pl
from jax.experimental.pallas import tpu as pltpu


def _round_up(x, m):
    return -(-x // m) * m


def _adjust_kernel(x_ref, w_ref, shift_ref, o_ref):
    # x_ref:     (1, Cin, TS)   spatial positions in the lane dim, compute dtype
    # w_ref:     (Cout, Cin)    1x1 conv weight with BN scale pre-folded
    # shift_ref: (Cout, 1)      f32: beta - running_mean * gamma / sqrt(var+eps)
    # o_ref:     (1, Cout, TS)  f32
    y = jnp.dot(w_ref[...], x_ref[0],
                preferred_element_type=jnp.float32)        # MXU: (Cout, TS)
    o_ref[0] = (y + shift_ref[...]).astype(o_ref.dtype)


def adjust_layer(x_nchw, conv_w, gamma, beta, run_mean, run_var,
                 eps=1e-5, compute_dtype=jnp.bfloat16, max_spatial_tile=2048):
    """Forward pass of AdjustLayer.

    x_nchw : (N, Cin, H, W) float32
    conv_w : (Cout, Cin, 1, 1) float32 (PyTorch Conv2d weight layout)
    gamma, beta, run_mean, run_var : (Cout,) float32 BatchNorm params (eval).
    compute_dtype : dtype of the pipelined inputs (bf16 halves HBM traffic;
                    accumulation is always f32).
    max_spatial_tile : lane-dim tile cap (128-multiple).  2048 is v7x-safe;
                       can be raised to 4096-8192 on v5e/v6e (128 MiB VMEM).
    """
    N, Cin, H, W = x_nchw.shape
    Cout = conv_w.shape[0]

    # Fold eval-mode BN into the conv:  y = w_scaled @ x + shift.
    inv_std = 1.0 / jnp.sqrt(run_var.astype(jnp.float32) + eps)
    scale = gamma.astype(jnp.float32) * inv_std                     # (Cout,)
    w_scaled = conv_w.reshape(Cout, Cin).astype(jnp.float32) * scale[:, None]
    shift = (beta.astype(jnp.float32)
             - run_mean.astype(jnp.float32) * scale).reshape(Cout, 1)

    crop = W < 20
    if crop:
        # Hard-coded 4:11 center crop, identical to the PyTorch module (any
        # W<20 that isn't ~15-16 gives the same shifted/clipped window as the
        # original).  The 1x1 conv + BN are pointwise in space, so crop the
        # INPUT and merge the batch dim into the lane axis: one grid step with
        # a denser lane occupancy instead of N steps of 49 masked lanes.
        l, r = 4, 4 + 7
        xc = x_nchw[:, :, l:r, l:r]                         # (N, Cin, Hc, Wc)
        Hc, Wc = xc.shape[2], xc.shape[3]
        x3 = xc.transpose(1, 0, 2, 3).reshape(1, Cin, N * Hc * Wc)  # tiny copy
        Nb, HW = 1, N * Hc * Wc
    else:
        x3 = x_nchw.reshape(N, Cin, H * W)                  # free reshape
        Nb, HW = N, H * W

    x3 = x3.astype(compute_dtype)
    w_k = w_scaled.astype(compute_dtype)

    # Spatial tile: full extent when small (block == full dim is always legal),
    # else a 128-aligned tile with a cdiv grid (trailing block masked).  With a
    # single batch, force >=2 spatial blocks so v7x's two TensorCores both get
    # work on the "parallel" axis.
    if HW <= max_spatial_tile:
        ts = HW
        if Nb == 1 and HW >= 256:
            ts = _round_up(-(-HW // 2), 128)                # ceil(HW/2) -> x128
    else:
        ts = max_spatial_tile                               # multiple of 128
    grid = (Nb, pl.cdiv(HW, ts))

    # VMEM budget derived from the actual double-buffered block bytes, clamped
    # to [16, 32] MiB — comfortable on v7x's 64 MiB physical VMEM.
    in_sz = jnp.dtype(compute_dtype).itemsize
    need = (2 * Cin * ts * in_sz          # x block, double-buffered
            + 2 * Cout * ts * 4           # f32 output block, double-buffered
            + 2 * Cout * Cin * in_sz      # weight (constant index_map)
            + 2 * Cout * 4)               # shift
    vmem_limit = int(min(max(need + (8 << 20), 16 << 20), 32 << 20))

    out3 = pl.pallas_call(
        _adjust_kernel,
        out_shape=jax.ShapeDtypeStruct((Nb, Cout, HW), jnp.float32),
        grid_spec=pltpu.PrefetchScalarGridSpec(
            num_scalar_prefetch=0,
            grid=grid,
            in_specs=[
                pl.BlockSpec((1, Cin, ts), lambda n, s: (n, 0, s)),
                pl.BlockSpec((Cout, Cin), lambda n, s: (0, 0)),
                pl.BlockSpec((Cout, 1), lambda n, s: (0, 0)),
            ],
            out_specs=pl.BlockSpec((1, Cout, ts), lambda n, s: (n, 0, s)),
        ),
        compiler_params=pltpu.CompilerParams(
            dimension_semantics=("parallel", "parallel"),
            vmem_limit_bytes=vmem_limit,
        ),
    )(x3, w_k, shift)

    if crop:
        # (1, Cout, N*Hc*Wc) -> (N, Cout, Hc, Wc); tiny transpose.
        return out3.reshape(Cout, N, Hc, Wc).transpose(1, 0, 2, 3)
    return out3.reshape(N, Cout, H, W)                      # free reshape


def reference(x_nchw, conv_w, gamma, beta, run_mean, run_var, eps=1e-5):
    # Pure-JAX reference: 1x1 conv as einsum + eval-mode BN + crop (on output).
    Cout, Cin = conv_w.shape[0], conv_w.shape[1]
    w = conv_w.reshape(Cout, Cin)
    y = jnp.einsum("nchw,oc->nohw", x_nchw, w,
                   precision=jax.lax.Precision.HIGHEST)
    inv_std = 1.0 / jnp.sqrt(run_var + eps)
    y = (y - run_mean[None, :, None, None]) * (gamma * inv_std)[None, :, None, None] \
        + beta[None, :, None, None]
    if x_nchw.shape[3] < 20:
        y = y[:, :, 4:11, 4:11]
    return y


if __name__ == "__main__":
    key = jax.random.PRNGKey(0)
    k_x, k_w, k_g, k_b, k_m, k_v, k_x2 = jax.random.split(key, 7)

    N, Cin, Cout, H, W = 2, 4, 8, 16, 16   # spatial < 20 -> crop branch taken

    x = jax.random.normal(k_x, (N, Cin, H, W), dtype=jnp.float32)
    conv_w = jax.random.normal(k_w, (Cout, Cin, 1, 1), dtype=jnp.float32) * 0.1
    gamma = 1.0 + 0.1 * jax.random.normal(k_g, (Cout,), dtype=jnp.float32)
    beta = 0.1 * jax.random.normal(k_b, (Cout,), dtype=jnp.float32)
    run_mean = 0.1 * jax.random.normal(k_m, (Cout,), dtype=jnp.float32)
    run_var = jnp.abs(jax.random.normal(k_v, (Cout,), dtype=jnp.float32)) + 0.5

    ref = reference(x, conv_w, gamma, beta, run_mean, run_var)

    # --- Crop branch (spatial 16 < 20), f32 compute: exact check -------------
    out_f32 = adjust_layer(x, conv_w, gamma, beta, run_mean, run_var,
                           compute_dtype=jnp.float32)
    out_f32 = jax.block_until_ready(out_f32)
    assert out_f32.shape == (N, Cout, 7, 7), out_f32.shape
    assert jnp.allclose(out_f32, ref, atol=1e-5, rtol=1e-5), "f32 crop mismatch"

    # --- Crop branch, default bf16 inputs: bf16-rounding tolerance -----------
    out_bf16 = adjust_layer(x, conv_w, gamma, beta, run_mean, run_var)
    out_bf16 = jax.block_until_ready(out_bf16)
    assert out_bf16.shape == (N, Cout, 7, 7), out_bf16.shape
    assert jnp.allclose(out_bf16, ref, atol=3e-2, rtol=3e-2), "bf16 crop mismatch"

    # --- No-crop branch (spatial >= 20), single batch: exercises the tiled
    #     grid path and the forced 2-way spatial split (v7x megacore) ---------
    H2 = W2 = 24
    x2 = jax.random.normal(k_x2, (1, Cin, H2, W2), dtype=jnp.float32)
    ref2 = reference(x2, conv_w, gamma, beta, run_mean, run_var)
    out2 = adjust_layer(x2, conv_w, gamma, beta, run_mean, run_var)
    out2 = jax.block_until_ready(out2)
    assert out2.shape == (1, Cout, H2, W2), out2.shape
    assert jnp.allclose(out2, ref2, atol=3e-2, rtol=3e-2), "bf16 no-crop mismatch"

    print("KERNEL_OK")
</pallas_src>

<mosaic_0001>
module attributes {stable_mosaic.version = 11 : i64} {
  func.func @_adjust_kernel(%arg0: i32, %arg1: i32, %arg2: memref<1x4x98xf32, #tpu.memory_space<vmem>>, %arg3: memref<8x4xf32, #tpu.memory_space<vmem>>, %arg4: memref<8x1xf32, #tpu.memory_space<vmem>>, %arg5: memref<1x8x98xf32, #tpu.memory_space<vmem>>) attributes {dimension_semantics = [#tpu.dimension_semantics<parallel>, #tpu.dimension_semantics<parallel>], iteration_bounds = array<i64: 1, 1>, scalar_prefetch = 0 : i64, scratch_operands = 0 : i64, tpu.core_type = #tpu.core_type<tc>, window_params = [{transform_indices = @transform_0, window_bounds = array<i64: 1, 4, 98>}, {pipeline_mode = #tpu.pipeline_mode<synchronous>, transform_indices = @transform_1, window_bounds = array<i64: 8, 4>}, {pipeline_mode = #tpu.pipeline_mode<synchronous>, transform_indices = @transform_2, window_bounds = array<i64: 8, 1>}, {transform_indices = @transform_3, window_bounds = array<i64: 1, 8, 98>}]} {
    %c0 = arith.constant 0 : index
    %c0_0 = arith.constant 0 : index
    %0 = vector.load %arg3[%c0, %c0_0] : memref<8x4xf32, #tpu.memory_space<vmem>>, vector<8x4xf32>
    %c0_1 = arith.constant 0 : index
    %c0_2 = arith.constant 0 : index
    %c0_3 = arith.constant 0 : index
    %1 = vector.load %arg2[%c0_1, %c0_2, %c0_3] : memref<1x4x98xf32, #tpu.memory_space<vmem>>, vector<1x4x98xf32>
    %2 = vector.shape_cast %1 : vector<1x4x98xf32> to vector<4x98xf32>
    %cst = arith.constant dense<0.000000e+00> : vector<8x98xf32>
    %3 = tpu.matmul %0, %2, %cst {dimension_numbers = #tpu.dot_dimension_numbers<[1], [0], [0], [1], [0, 0, 1, 1], [], []>} : vector<8x4xf32>, vector<4x98xf32>, vector<8x98xf32> -> vector<8x98xf32>
    %c0_4 = arith.constant 0 : index
    %c0_5 = arith.constant 0 : index
    %4 = vector.load %arg4[%c0_4, %c0_5] : memref<8x1xf32, #tpu.memory_space<vmem>>, vector<8x1xf32>
    %5 = vector.broadcast %4 : vector<8x1xf32> to vector<8x98xf32>
    %6 = arith.addf %3, %5 : vector<8x98xf32>
    %c0_6 = arith.constant 0 : index
    %c0_7 = arith.constant 0 : index
    %c0_8 = arith.constant 0 : index
    %7 = vector.load %arg5[%c0_6, %c0_7, %c0_8] : memref<1x8x98xf32, #tpu.memory_space<vmem>>, vector<1x8x98xf32>
    %8 = vector.shape_cast %7 : vector<1x8x98xf32> to vector<8x98xf32>
    %9 = vector.shape_cast %6 : vector<8x98xf32> to vector<1x8x98xf32>
    tpu.vector_store %arg5[%c0_6, %c0_7, %c0_8], %9 {strides = array<i32>} : memref<1x8x98xf32, #tpu.memory_space<vmem>>, vector<1x8x98xf32>,
    return
  }
  func.func @transform_0(%arg0: i32, %arg1: i32) -> (i32, i32, i32) {
    %c0_i32 = arith.constant 0 : i32
    %c0_i32_0 = arith.constant 0 : i32
    return %arg0, %c0_i32, %arg1 : i32, i32, i32
  }
  func.func @transform_1(%arg0: i32, %arg1: i32) -> (i32, i32) {
    %c0_i32 = arith.constant 0 : i32
    %c0_i32_0 = arith.constant 0 : i32
    %c0_i32_1 = arith.constant 0 : i32
    return %c0_i32, %c0_i32_0 : i32, i32
  }
  func.func @transform_2(%arg0: i32, %arg1: i32) -> (i32, i32) {
    %c0_i32 = arith.constant 0 : i32
    %c0_i32_0 = arith.constant 0 : i32
    %c0_i32_1 = arith.constant 0 : i32
    return %c0_i32, %c0_i32_0 : i32, i32
  }
  func.func @transform_3(%arg0: i32, %arg1: i32) -> (i32, i32, i32) {
    %c0_i32 = arith.constant 0 : i32
    %c0_i32_0 = arith.constant 0 : i32
    return %arg0, %c0_i32, %arg1 : i32, i32, i32
  }
}

</mosaic_0001>

<llo_original>
// kernel: tpu_custom_call.1
$region0: #{tpu_custom_call.1}
  #allocation0 [shape = 'u32[]', space=smem, size = 0x4, offset = 0x4, fixed_abs, tag = 'smem constant byte address 0x4 - core index']
  #allocation1 [shape = 'u32[72,128]{1,0:T(1,128)}', space=vmem, size = 0x9000, scoped, tag = 'internal scratch']
  %s0 = inlined_call_operand.vmem [shape: f32[1,4,98], index: 0, kind: input, shape index: {}]
  %s1 = inlined_call_operand.vmem [shape: f32[8,4], index: 1, kind: input, shape index: {}]
  %s2 = inlined_call_operand.vmem [shape: f32[8,1], index: 2, kind: input, shape index: {}]
  %s3 = inlined_call_operand.hbm [shape: f32[1,8,98], index: 3, kind: output, shape index: {}]
  %s4 = sld [smem:[#allocation0]]
  $region22: #{tpu_custom_call.1} parent=0
    _
  %s6 = ssub.s32 1, %s4
  %s7 = scalar_select 0, %s6, %s4
  $region1: #{tpu_custom_call.1} parent=0
    #allocation2 [shape = 'u8[4096]{0}', space=vmem, size = 0x1000, scoped, tag = 'output window, operand 0, single buffered']
    #allocation3 [shape = 's32[1]{0}', space=sflag, size = 0x4, scoped, tag = 'scoped memory for tpu_custom_call.1']
    %8 = vsyncpa [#allocation3], 0
    // Predicated region
    $region2: #{tpu_custom_call.1} parent=1 // pred_check
      _
    $region3: #{tpu_custom_call.1} parent=1 // pred_check_branch
      %10 = sbr.rel (0) target = $region5
    $region4: #{tpu_custom_call.1} parent=1 // pred_region
      _
    $region5: #{tpu_custom_call.1} parent=1 // pred_fallthru
      _
    // Predicated region
    $region6: #{tpu_custom_call.1} parent=1 // pred_check
      _
    $region7: #{tpu_custom_call.1} parent=1 // pred_check_branch
      %12 = sbr.rel (0) target = $region9
    $region8: #{tpu_custom_call.1} parent=1 // pred_region
      _
    $region9: #{tpu_custom_call.1} parent=1 // pred_fallthru
      _
    // Predicated region
    $region10: #{tpu_custom_call.1} parent=1 // pred_check
      _
    $region11: #{tpu_custom_call.1} parent=1 // pred_check_branch
      %14 = sbr.rel (0) target = $region13
    $region12: #{tpu_custom_call.1} parent=1 // pred_region
      _
    $region13: #{tpu_custom_call.1} parent=1 // pred_fallthru
      _
    %v15 = vld [vmem:[%s1] sm:$0xff]
    %v16 = vld [vmem:[%s0] sm:$0xf]
    %v17 = vld [vmem:[%s2] sm:$0xff]
    %19 = vset.pattern.permute.xlu0 0
    %20 = vperm.xlu0 %19, %v17
    %v21 = vpop.permute.xlu0 %20
    %vm23 = vcmask 31744
    %v25 = vsel %vm23, %v15, 0
    %vm27 = vcmask 1043456
    %v29 = vsel %vm27, %v16, 0
    %31 = vmatpush.msra.mxu0 0.0
    %32 = vmatpush.msra.mxu0 0.0
    %33 = vmatpush.msra.mxu0 0.0
    %34 = vmatpush.msra.mxu0 0.0
    %35 = vmatpush.msra.mxu0 0.0
    %36 = vmatpush.msra.mxu0 0.0
    %37 = vmatpush.msra.mxu0 0.0
    %38 = vmatpush.msra.mxu0 0.0
    %39 = vmatpush.msra.mxu0 0.0
    %40 = vmatpush.msra.mxu0 0.0
    %41 = vmatpush.msra.mxu0 0.0
    %42 = vmatpush.msra.mxu0 0.0
    %43 = vmatpush.msra.mxu0 0.0
    %44 = vmatpush.msra.mxu0 0.0
    %45 = vmatpush.msra.mxu0 0.0
    %46 = vmatpush.msra.mxu0 %v29
    %47 = vmatmul.f32.gmra.mxu0 %v25
    %v48 = vpop.f32.mrf.mxu0
    %v49 = vadd.f32 %v21, %v48
    %50 = vdwg.mxu0
    %vm51 = vcmask 801792
    %52 = vst.msk [vmem:[#allocation2] sm:$0xff] %vm51, %v49
    // Predicated region
    $region14: #{tpu_custom_call.1} parent=1 // pred_check
      _
    $region15: #{tpu_custom_call.1} parent=1 // pred_check_branch
      %54 = sbr.rel (0) target = $region17
    $region16: #{tpu_custom_call.1} parent=1 // pred_region
      %56 = vsyncadd [#allocation3], 0
      %s58 = sshll.u32 [#allocation2], 4
      %s59 = int_to_ptr.vmem [resolvable:$true] %s58
      %s60 = sshll.u32 %s3, 4
      %s61 = int_to_ptr.hbm [resolvable:$true] %s60
      %63 = dma.vmem_to_hbm [thread:$0]  %s59, 128, %s61, [#allocation3]
    $region17: #{tpu_custom_call.1} parent=1 // pred_fallthru
      _
    // Predicated region
    $region18: #{tpu_custom_call.1} parent=1 // pred_check
      _
    $region19: #{tpu_custom_call.1} parent=1 // pred_check_branch
      %65 = sbr.rel (0) target = $region21
    $region20: #{tpu_custom_call.1} parent=1 // pred_region
      %67 = dma.done [#allocation3], 128
    $region21: #{tpu_custom_call.1} parent=1 // pred_fallthru
      _
    %68 = vsyncpa [#allocation3], 1

</llo_original>
